<compile_context>
chip_gen: v6e
topology: v6e:2x2x1
jax: 0.10.0
libtpu: 0.0.40
codegen_flags: <defaults>
</compile_context>

<pallas_src>
import functools

import jax
import jax.numpy as jnp
from jax.experimental import pallas as pl
from jax.experimental.pallas import tpu as pltpu

LANES = 128
MAX_ROW_BLOCK = 4096      # (4096,128) f32 tile = 2 MiB; 2 inputs x 2 buffers = 8 MiB VMEM
_NEUTRAL_LOGIT = -1.0e4   # sigmoid(x) == 0 and BCE-with-logits(x, t=0) == 0 in f32


def _round_up(v, m):
    return ((v + m - 1) // m) * m


def _dice_bce_sums_kernel(x_ref, t_ref, out_ref,
                          acc_pt, acc_p, acc_t, acc_bce,
                          *, row_block, inner, n_splits, tail_rows, use_sigmoid):
    c = pl.program_id(0)   # split ("parallel") axis
    i = pl.program_id(1)   # reduction ("arbitrary") axis

    @pl.when(i == 0)
    def _init():
        acc_pt[...] = jnp.zeros_like(acc_pt)
        acc_p[...] = jnp.zeros_like(acc_p)
        acc_t[...] = jnp.zeros_like(acc_t)
        acc_bce[...] = jnp.zeros_like(acc_bce)

    def fold(v):
        # (row_block, 128) -> (8, 128) with elementwise adds only (VPU).  The
        # expensive cross-lane reductions happen once, in JAX, on 16 KiB.
        return jnp.sum(v.reshape(row_block // 8, 8, LANES), axis=0)

    def accumulate(valid_rows):
        x = x_ref[...].astype(jnp.float32)
        t = t_ref[...].astype(jnp.float32)

        if use_sigmoid:
            # Fused sigmoid + BCE-with-logits:
            #   p   = sigmoid(x)
            #   bce = relu(x) - x*t + log1p(exp(-|x|))
            # Divide = EUP approx reciprocal seed + one Newton step (rel err
            # ~1e-7), keeping the full-precision divide off the VALU.
            # NOTE: unlike torch's binary_cross_entropy this form does not clamp
            # the log terms at -100; it only differs for |logits| > 100.
            e = jnp.exp(-jnp.abs(x))
            d = 1.0 + e
            r = pl.reciprocal(d, approx=True)
            r = r * (2.0 - d * r)
            p = jnp.where(x >= 0, r, e * r)
            bce = jnp.maximum(x, 0.0) - x * t + jnp.log1p(e)
        else:
            # Inputs are already probabilities; match torch BCE's log clamp.
            p = x
            log_p = jnp.maximum(jnp.log(p), -100.0)
            log_1mp = jnp.maximum(jnp.log1p(-p), -100.0)
            bce = -(t * log_p + (1.0 - t) * log_1mp)

        pt_v, p_v, t_v, bce_v = p * t, p, t, bce
        if valid_rows is not None:
            # Row-granularity mask -- traced/executed only for the single
            # partial tail block.  Select-based so garbage (NaN/Inf) in the
            # BlockSpec padding region never leaks into the sums.
            row = jax.lax.broadcasted_iota(jnp.int32, (row_block, LANES), 0)
            m = row < valid_rows
            zero = jnp.float32(0.0)
            pt_v = jnp.where(m, pt_v, zero)
            p_v = jnp.where(m, p_v, zero)
            t_v = jnp.where(m, t_v, zero)
            bce_v = jnp.where(m, bce_v, zero)

        acc_pt[...] += fold(pt_v)
        acc_p[...] += fold(p_v)
        acc_t[...] += fold(t_v)
        acc_bce[...] += fold(bce_v)

    if tail_rows is None:
        # Shape divides evenly (or was padded with neutral values): pure
        # unmasked streaming accumulate on every step.
        accumulate(None)
    else:
        is_tail = jnp.logical_and(c == n_splits - 1, i == inner - 1)

        @pl.when(jnp.logical_not(is_tail))
        def _bulk():
            accumulate(None)

        @pl.when(is_tail)
        def _tail():
            accumulate(tail_rows)

    @pl.when(i == inner - 1)
    def _finalize():
        out_ref[0, 0, :, :] = acc_pt[...]
        out_ref[0, 1, :, :] = acc_p[...]
        out_ref[0, 2, :, :] = acc_t[...]
        out_ref[0, 3, :, :] = acc_bce[...]


def dice_bce_loss(inputs, targets, smooth=1.0, use_sigmoid=True,
                  max_row_block=MAX_ROW_BLOCK):
    """Pallas implementation of DiceBCELoss.forward (returns a scalar f32)."""
    x = inputs.reshape(-1)
    t = targets.reshape(-1)
    n = x.shape[0]

    max_row_block = max(8, (max_row_block // 8) * 8)
    lane_pad = (-n) % LANES
    rows = (n + lane_pad) // LANES
    row_block = min(max_row_block, _round_up(max(rows, 1), 8))
    total_blocks = pl.cdiv(rows, row_block)

    # Two-way "parallel" split over the leading grid axis: ~2x on 2-TC chips
    # (v7x); on v5e/v6e it is just two sequential outer slices.  Only used when
    # the block count splits evenly so no grid position is ever fully OOB.
    n_splits = 2 if (total_blocks >= 2 and total_blocks % 2 == 0) else 1
    inner = total_blocks // n_splits

    if lane_pad:
        # A copy is unavoidable here -- pad with NEUTRAL values (exactly zero
        # contribution to all four sums) up to whole blocks, so the kernel
        # needs no mask at all in this case.
        pad = total_blocks * row_block * LANES - n
        x_pad_val = _NEUTRAL_LOGIT if use_sigmoid else 0.0
        x = jnp.pad(x, (0, pad), constant_values=x_pad_val)
        t = jnp.pad(t, (0, pad), constant_values=0.0)
        tail_rows = None
    else:
        # No copy: at most one partial tail block, masked in-kernel only there.
        tail_rows = (None if rows % row_block == 0
                     else rows - (total_blocks - 1) * row_block)

    x2 = x.reshape(-1, LANES)
    t2 = t.reshape(-1, LANES)

    kernel = functools.partial(
        _dice_bce_sums_kernel,
        row_block=row_block, inner=inner, n_splits=n_splits,
        tail_rows=tail_rows, use_sigmoid=bool(use_sigmoid))

    partial_sums = pl.pallas_call(
        kernel,
        out_shape=jax.ShapeDtypeStruct((n_splits, 4, 8, LANES), jnp.float32),
        grid_spec=pltpu.PrefetchScalarGridSpec(
            num_scalar_prefetch=0,
            grid=(n_splits, inner),
            in_specs=[
                pl.BlockSpec((row_block, LANES), lambda c, i: (c * inner + i, 0)),
                pl.BlockSpec((row_block, LANES), lambda c, i: (c * inner + i, 0)),
            ],
            out_specs=pl.BlockSpec((1, 4, 8, LANES), lambda c, i: (c, 0, 0, 0)),
            scratch_shapes=[pltpu.VMEM((8, LANES), jnp.float32)] * 4,
        ),
        compiler_params=pltpu.CompilerParams(
            dimension_semantics=("parallel", "arbitrary"),
            vmem_limit_bytes=32 * 1024 * 1024),
    )(x2, t2)

    # Tiny (<=16 KiB) cross-lane / cross-split reduction in JAX.
    sums = jnp.sum(partial_sums, axis=(0, 2, 3))
    sum_pt, sum_p, sum_t, sum_bce = sums[0], sums[1], sums[2], sums[3]

    # Scalar glue (Dice + mean BCE), matching the PyTorch module.
    dice = (2.0 * sum_pt + smooth) / (sum_p + sum_t + smooth)
    dice_loss = 1.0 - dice
    bce = sum_bce / jnp.float32(n)
    return bce + dice_loss


def _reference(inputs, targets, smooth=1.0, use_sigmoid=True):
    p = jax.nn.sigmoid(inputs) if use_sigmoid else inputs
    p = p.reshape(-1).astype(jnp.float32)
    t = targets.reshape(-1).astype(jnp.float32)
    inter = jnp.sum(p * t)
    union = jnp.sum(p) + jnp.sum(t)
    dice_loss = 1.0 - (2.0 * inter + smooth) / (union + smooth)
    log_p = jnp.maximum(jnp.log(p), -100.0)
    log_1mp = jnp.maximum(jnp.log1p(-p), -100.0)
    bce = jnp.mean(-(t * log_p + (1.0 - t) * log_1mp))
    return bce + dice_loss


def _check(x, t, use_sigmoid=True, **kw):
    got = jax.block_until_ready(dice_bce_loss(x, t, smooth=1.0,
                                              use_sigmoid=use_sigmoid, **kw))
    ref = _reference(x, t, smooth=1.0, use_sigmoid=use_sigmoid)
    assert jnp.allclose(got, ref, atol=1e-5, rtol=1e-5), (got, ref)
    return got


if __name__ == "__main__":
    key = jax.random.PRNGKey(0)
    k1, k2, k3, k4, k5, k6 = jax.random.split(key, 6)

    # Main case: NCHW logits + binary targets, small shape, no mask needed.
    x = jax.random.normal(k1, (2, 4, 16, 16), dtype=jnp.float32) * 3.0
    t = (jax.random.uniform(k2, (2, 4, 16, 16)) > 0.5).astype(jnp.float32)
    _check(x, t)

    # Exercise the 2-way "parallel" split path (no tail).
    _check(x, t, max_row_block=8)

    # Exercise split + masked partial tail block (n % 128 == 0, rows % block != 0).
    x3 = jax.random.normal(k3, (2, 4, 28, 16), dtype=jnp.float32)
    t3 = (jax.random.uniform(k4, (2, 4, 28, 16)) > 0.5).astype(jnp.float32)
    _check(x3, t3, max_row_block=8)

    # Exercise the neutral-value lane-pad path (n % 128 != 0).
    x4 = jax.random.normal(k5, (2, 3, 17, 17), dtype=jnp.float32)
    t4 = (jax.random.uniform(k6, (2, 3, 17, 17)) > 0.5).astype(jnp.float32)
    _check(x4, t4)

    # Exercise the use_sigmoid=False (probability-input) branch.
    p = jax.random.uniform(k1, (2, 4, 16, 16), minval=0.05, maxval=0.95)
    _check(p, t, use_sigmoid=False)

    print("KERNEL_OK")
</pallas_src>

<mosaic_0001>
module attributes {stable_mosaic.version = 11 : i64} {
  func.func @_dice_bce_sums_kernel(%arg0: i32, %arg1: i32, %arg2: memref<16x128xf32, #tpu.memory_space<vmem>>, %arg3: memref<16x128xf32, #tpu.memory_space<vmem>>, %arg4: memref<1x4x8x128xf32, #tpu.memory_space<vmem>>, %arg5: memref<8x128xf32, #tpu.memory_space<vmem>>, %arg6: memref<8x128xf32, #tpu.memory_space<vmem>>, %arg7: memref<8x128xf32, #tpu.memory_space<vmem>>, %arg8: memref<8x128xf32, #tpu.memory_space<vmem>>) attributes {dimension_semantics = [#tpu.dimension_semantics<parallel>, #tpu.dimension_semantics<arbitrary>], iteration_bounds = array<i64: 1, 1>, scalar_prefetch = 0 : i64, scratch_operands = 4 : i64, tpu.core_type = #tpu.core_type<tc>, window_params = [{transform_indices = @transform_0, window_bounds = array<i64: 16, 128>}, {transform_indices = @transform_1, window_bounds = array<i64: 16, 128>}, {transform_indices = @transform_2, window_bounds = array<i64: 1, 4, 8, 128>}]} {
    %c0_i32 = arith.constant 0 : i32
    %0 = arith.cmpi eq, %arg1, %c0_i32 : i32
    %1 = arith.extui %0 : i1 to i32
    %c0_i32_0 = arith.constant 0 : i32
    %2 = arith.cmpi ne, %1, %c0_i32_0 : i32
    scf.if %2 {
      %cst_30 = arith.constant 0.000000e+00 : f32
      %50 = vector.broadcast %cst_30 : f32 to vector<8x128xf32>
      %c0_31 = arith.constant 0 : index
      %c0_32 = arith.constant 0 : index
      %51 = vector.load %arg5[%c0_31, %c0_32] : memref<8x128xf32, #tpu.memory_space<vmem>>, vector<8x128xf32>
      tpu.vector_store %arg5[%c0_31, %c0_32], %50 {strides = array<i32>} : memref<8x128xf32, #tpu.memory_space<vmem>>, vector<8x128xf32>,
      %cst_33 = arith.constant 0.000000e+00 : f32
      %52 = vector.broadcast %cst_33 : f32 to vector<8x128xf32>
      %c0_34 = arith.constant 0 : index
      %c0_35 = arith.constant 0 : index
      %53 = vector.load %arg6[%c0_34, %c0_35] : memref<8x128xf32, #tpu.memory_space<vmem>>, vector<8x128xf32>
      tpu.vector_store %arg6[%c0_34, %c0_35], %52 {strides = array<i32>} : memref<8x128xf32, #tpu.memory_space<vmem>>, vector<8x128xf32>,
      %cst_36 = arith.constant 0.000000e+00 : f32
      %54 = vector.broadcast %cst_36 : f32 to vector<8x128xf32>
      %c0_37 = arith.constant 0 : index
      %c0_38 = arith.constant 0 : index
      %55 = vector.load %arg7[%c0_37, %c0_38] : memref<8x128xf32, #tpu.memory_space<vmem>>, vector<8x128xf32>
      tpu.vector_store %arg7[%c0_37, %c0_38], %54 {strides = array<i32>} : memref<8x128xf32, #tpu.memory_space<vmem>>, vector<8x128xf32>,
      %cst_39 = arith.constant 0.000000e+00 : f32
      %56 = vector.broadcast %cst_39 : f32 to vector<8x128xf32>
      %c0_40 = arith.constant 0 : index
      %c0_41 = arith.constant 0 : index
      %57 = vector.load %arg8[%c0_40, %c0_41] : memref<8x128xf32, #tpu.memory_space<vmem>>, vector<8x128xf32>
      tpu.vector_store %arg8[%c0_40, %c0_41], %56 {strides = array<i32>} : memref<8x128xf32, #tpu.memory_space<vmem>>, vector<8x128xf32>,
    } else {
    }
    %c0 = arith.constant 0 : index
    %c0_1 = arith.constant 0 : index
    %3 = vector.load %arg2[%c0, %c0_1] : memref<16x128xf32, #tpu.memory_space<vmem>>, vector<16x128xf32>
    %c0_2 = arith.constant 0 : index
    %c0_3 = arith.constant 0 : index
    %4 = vector.load %arg3[%c0_2, %c0_3] : memref<16x128xf32, #tpu.memory_space<vmem>>, vector<16x128xf32>
    %5 = math.absf %3 : vector<16x128xf32>
    %cst = arith.constant 0.000000e+00 : f32
    %6 = vector.broadcast %cst : f32 to vector<16x128xf32>
    %7 = arith.subf %6, %5 : vector<16x128xf32>
    %8 = math.exp %7 : vector<16x128xf32>
    %cst_4 = arith.constant 1.000000e+00 : f32
    %9 = vector.broadcast %cst_4 : f32 to vector<16x128xf32>
    %10 = arith.addf %9, %8 : vector<16x128xf32>
    %11 = tpu.reciprocal %10 {approx = true} : vector<16x128xf32> -> vector<16x128xf32>
    %12 = arith.mulf %10, %11 : vector<16x128xf32>
    %cst_5 = arith.constant 2.000000e+00 : f32
    %13 = vector.broadcast %cst_5 : f32 to vector<16x128xf32>
    %14 = arith.subf %13, %12 : vector<16x128xf32>
    %15 = arith.mulf %11, %14 : vector<16x128xf32>
    %cst_6 = arith.constant 0.000000e+00 : f32
    %16 = vector.broadcast %cst_6 : f32 to vector<16x128xf32>
    %17 = arith.cmpf oge, %3, %16 : vector<16x128xf32>
    %18 = arith.mulf %8, %15 : vector<16x128xf32>
    %19 = arith.select %17, %15, %18 : vector<16x128xi1>, vector<16x128xf32>
    %cst_7 = arith.constant 0.000000e+00 : f32
    %20 = vector.broadcast %cst_7 : f32 to vector<16x128xf32>
    %21 = arith.maximumf %3, %20 : vector<16x128xf32>
    %22 = arith.mulf %3, %4 : vector<16x128xf32>
    %23 = arith.subf %21, %22 : vector<16x128xf32>
    %24 = math.log1p %8 : vector<16x128xf32>
    %25 = arith.addf %23, %24 : vector<16x128xf32>
    %26 = arith.mulf %19, %4 : vector<16x128xf32>
    %c0_8 = arith.constant 0 : index
    %c0_9 = arith.constant 0 : index
    %27 = vector.load %arg5[%c0_8, %c0_9] : memref<8x128xf32, #tpu.memory_space<vmem>>, vector<8x128xf32>
    %28 = vector.shape_cast %26 : vector<16x128xf32> to vector<2x8x128xf32>
    %cst_10 = arith.constant dense<0.000000e+00> : vector<8x128xf32>
    %29 = vector.multi_reduction <add>, %28, %cst_10 [0] : vector<2x8x128xf32> to vector<8x128xf32>
    %30 = arith.addf %27, %29 : vector<8x128xf32>
    %c0_11 = arith.constant 0 : index
    %c0_12 = arith.constant 0 : index
    %31 = vector.load %arg5[%c0_11, %c0_12] : memref<8x128xf32, #tpu.memory_space<vmem>>, vector<8x128xf32>
    tpu.vector_store %arg5[%c0_11, %c0_12], %30 {strides = array<i32>} : memref<8x128xf32, #tpu.memory_space<vmem>>, vector<8x128xf32>,
    %c0_13 = arith.constant 0 : index
    %c0_14 = arith.constant 0 : index
    %32 = vector.load %arg6[%c0_13, %c0_14] : memref<8x128xf32, #tpu.memory_space<vmem>>, vector<8x128xf32>
    %33 = vector.shape_cast %19 : vector<16x128xf32> to vector<2x8x128xf32>
    %cst_15 = arith.constant dense<0.000000e+00> : vector<8x128xf32>
    %34 = vector.multi_reduction <add>, %33, %cst_15 [0] : vector<2x8x128xf32> to vector<8x128xf32>
    %35 = arith.addf %32, %34 : vector<8x128xf32>
    %c0_16 = arith.constant 0 : index
    %c0_17 = arith.constant 0 : index
    %36 = vector.load %arg6[%c0_16, %c0_17] : memref<8x128xf32, #tpu.memory_space<vmem>>, vector<8x128xf32>
    tpu.vector_store %arg6[%c0_16, %c0_17], %35 {strides = array<i32>} : memref<8x128xf32, #tpu.memory_space<vmem>>, vector<8x128xf32>,
    %c0_18 = arith.constant 0 : index
    %c0_19 = arith.constant 0 : index
    %37 = vector.load %arg7[%c0_18, %c0_19] : memref<8x128xf32, #tpu.memory_space<vmem>>, vector<8x128xf32>
    %38 = vector.shape_cast %4 : vector<16x128xf32> to vector<2x8x128xf32>
    %cst_20 = arith.constant dense<0.000000e+00> : vector<8x128xf32>
    %39 = vector.multi_reduction <add>, %38, %cst_20 [0] : vector<2x8x128xf32> to vector<8x128xf32>
    %40 = arith.addf %37, %39 : vector<8x128xf32>
    %c0_21 = arith.constant 0 : index
    %c0_22 = arith.constant 0 : index
    %41 = vector.load %arg7[%c0_21, %c0_22] : memref<8x128xf32, #tpu.memory_space<vmem>>, vector<8x128xf32>
    tpu.vector_store %arg7[%c0_21, %c0_22], %40 {strides = array<i32>} : memref<8x128xf32, #tpu.memory_space<vmem>>, vector<8x128xf32>,
    %c0_23 = arith.constant 0 : index
    %c0_24 = arith.constant 0 : index
    %42 = vector.load %arg8[%c0_23, %c0_24] : memref<8x128xf32, #tpu.memory_space<vmem>>, vector<8x128xf32>
    %43 = vector.shape_cast %25 : vector<16x128xf32> to vector<2x8x128xf32>
    %cst_25 = arith.constant dense<0.000000e+00> : vector<8x128xf32>
    %44 = vector.multi_reduction <add>, %43, %cst_25 [0] : vector<2x8x128xf32> to vector<8x128xf32>
    %45 = arith.addf %42, %44 : vector<8x128xf32>
    %c0_26 = arith.constant 0 : index
    %c0_27 = arith.constant 0 : index
    %46 = vector.load %arg8[%c0_26, %c0_27] : memref<8x128xf32, #tpu.memory_space<vmem>>, vector<8x128xf32>
    tpu.vector_store %arg8[%c0_26, %c0_27], %45 {strides = array<i32>} : memref<8x128xf32, #tpu.memory_space<vmem>>, vector<8x128xf32>,
    %c0_i32_28 = arith.constant 0 : i32
    %47 = arith.cmpi eq, %arg1, %c0_i32_28 : i32
    %48 = arith.extui %47 : i1 to i32
    %c0_i32_29 = arith.constant 0 : i32
    %49 = arith.cmpi ne, %48, %c0_i32_29 : i32
    scf.if %49 {
      %c0_30 = arith.constant 0 : index
      %c0_31 = arith.constant 0 : index
      %50 = vector.load %arg5[%c0_30, %c0_31] : memref<8x128xf32, #tpu.memory_space<vmem>>, vector<8x128xf32>
      %c0_32 = arith.constant 0 : index
      %c0_33 = arith.constant 0 : index
      %c0_34 = arith.constant 0 : index
      %c0_35 = arith.constant 0 : index
      %51 = vector.load %arg4[%c0_32, %c0_33, %c0_34, %c0_35] : memref<1x4x8x128xf32, #tpu.memory_space<vmem>>, vector<1x1x8x128xf32>
      %52 = vector.shape_cast %51 : vector<1x1x8x128xf32> to vector<8x128xf32>
      %53 = vector.shape_cast %50 : vector<8x128xf32> to vector<1x1x8x128xf32>
      tpu.vector_store %arg4[%c0_32, %c0_33, %c0_34, %c0_35], %53 {strides = array<i32>} : memref<1x4x8x128xf32, #tpu.memory_space<vmem>>, vector<1x1x8x128xf32>,
      %c0_36 = arith.constant 0 : index
      %c0_37 = arith.constant 0 : index
      %54 = vector.load %arg6[%c0_36, %c0_37] : memref<8x128xf32, #tpu.memory_space<vmem>>, vector<8x128xf32>
      %c0_38 = arith.constant 0 : index
      %c1 = arith.constant 1 : index
      %c0_39 = arith.constant 0 : index
      %c0_40 = arith.constant 0 : index
      %55 = vector.load %arg4[%c0_38, %c1, %c0_39, %c0_40] : memref<1x4x8x128xf32, #tpu.memory_space<vmem>>, vector<1x1x8x128xf32>
      %56 = vector.shape_cast %55 : vector<1x1x8x128xf32> to vector<8x128xf32>
      %57 = vector.shape_cast %54 : vector<8x128xf32> to vector<1x1x8x128xf32>
      tpu.vector_store %arg4[%c0_38, %c1, %c0_39, %c0_40], %57 {strides = array<i32>} : memref<1x4x8x128xf32, #tpu.memory_space<vmem>>, vector<1x1x8x128xf32>,
      %c0_41 = arith.constant 0 : index
      %c0_42 = arith.constant 0 : index
      %58 = vector.load %arg7[%c0_41, %c0_42] : memref<8x128xf32, #tpu.memory_space<vmem>>, vector<8x128xf32>
      %c0_43 = arith.constant 0 : index
      %c2 = arith.constant 2 : index
      %c0_44 = arith.constant 0 : index
      %c0_45 = arith.constant 0 : index
      %59 = vector.load %arg4[%c0_43, %c2, %c0_44, %c0_45] : memref<1x4x8x128xf32, #tpu.memory_space<vmem>>, vector<1x1x8x128xf32>
      %60 = vector.shape_cast %59 : vector<1x1x8x128xf32> to vector<8x128xf32>
      %61 = vector.shape_cast %58 : vector<8x128xf32> to vector<1x1x8x128xf32>
      tpu.vector_store %arg4[%c0_43, %c2, %c0_44, %c0_45], %61 {strides = array<i32>} : memref<1x4x8x128xf32, #tpu.memory_space<vmem>>, vector<1x1x8x128xf32>,
      %c0_46 = arith.constant 0 : index
      %c0_47 = arith.constant 0 : index
      %62 = vector.load %arg8[%c0_46, %c0_47] : memref<8x128xf32, #tpu.memory_space<vmem>>, vector<8x128xf32>
      %c0_48 = arith.constant 0 : index
      %c3 = arith.constant 3 : index
      %c0_49 = arith.constant 0 : index
      %c0_50 = arith.constant 0 : index
      %63 = vector.load %arg4[%c0_48, %c3, %c0_49, %c0_50] : memref<1x4x8x128xf32, #tpu.memory_space<vmem>>, vector<1x1x8x128xf32>
      %64 = vector.shape_cast %63 : vector<1x1x8x128xf32> to vector<8x128xf32>
      %65 = vector.shape_cast %62 : vector<8x128xf32> to vector<1x1x8x128xf32>
      tpu.vector_store %arg4[%c0_48, %c3, %c0_49, %c0_50], %65 {strides = array<i32>} : memref<1x4x8x128xf32, #tpu.memory_space<vmem>>, vector<1x1x8x128xf32>,
    } else {
    }
    return
  }
  func.func @transform_0(%arg0: i32, %arg1: i32) -> (i32, i32) {
    %c1_i32 = arith.constant 1 : i32
    %0 = arith.muli %arg0, %c1_i32 : i32
    %1 = arith.addi %0, %arg1 : i32
    %c0_i32 = arith.constant 0 : i32
    %c0_i32_0 = arith.constant 0 : i32
    return %1, %c0_i32 : i32, i32
  }
  func.func @transform_1(%arg0: i32, %arg1: i32) -> (i32, i32) {
    %c1_i32 = arith.constant 1 : i32
    %0 = arith.muli %arg0, %c1_i32 : i32
    %1 = arith.addi %0, %arg1 : i32
    %c0_i32 = arith.constant 0 : i32
    %c0_i32_0 = arith.constant 0 : i32
    return %1, %c0_i32 : i32, i32
  }
  func.func @transform_2(%arg0: i32, %arg1: i32) -> (i32, i32, i32, i32) {
    %c0_i32 = arith.constant 0 : i32
    %c0_i32_0 = arith.constant 0 : i32
    %c0_i32_1 = arith.constant 0 : i32
    %c0_i32_2 = arith.constant 0 : i32
    return %arg0, %c0_i32, %c0_i32_0, %c0_i32_1 : i32, i32, i32, i32
  }
}

</mosaic_0001>

<llo_original>
// kernel: tpu_custom_call.1
$region0: #{tpu_custom_call.1}
  #allocation0 [shape = 'u32[]', space=smem, size = 0x4, offset = 0x4, fixed_abs, tag = 'smem constant byte address 0x4 - core index']
  #allocation1 [shape = 'u32[144,128]{1,0:T(1,128)}', space=vmem, size = 0x12000, scoped, tag = 'internal scratch']
  #allocation2 [shape = 'f32[8,128]{1,0:T(8,128)}', space=vmem, size = 0x1000, scoped, tag = 'scratch operand']
  #allocation3 [shape = 'f32[8,128]{1,0:T(8,128)}', space=vmem, size = 0x1000, scoped, tag = 'scratch operand']
  #allocation4 [shape = 'f32[8,128]{1,0:T(8,128)}', space=vmem, size = 0x1000, scoped, tag = 'scratch operand']
  #allocation5 [shape = 'f32[8,128]{1,0:T(8,128)}', space=vmem, size = 0x1000, scoped, tag = 'scratch operand']
  %s0 = inlined_call_operand.hbm [shape: f32[16,128], index: 0, kind: input, shape index: {}]
  %s1 = inlined_call_operand.hbm [shape: f32[16,128], index: 1, kind: input, shape index: {}]
  %s2 = inlined_call_operand.hbm [shape: f32[1,4,8,128], index: 2, kind: output, shape index: {}]
  %s3 = sld [smem:[#allocation0]]
  $region34: #{tpu_custom_call.1} parent=0
    _
  %s5 = ssub.s32 1, %s3
  %s6 = scalar_select 0, %s5, %s3
  $region1: #{tpu_custom_call.1} parent=0
    #allocation6 [shape = 'u8[8192]{0}', space=vmem, size = 0x2000, scoped, tag = 'input window, operand 0, single buffered']
    #allocation7 [shape = 's32[1]{0}', space=sflag, size = 0x4, scoped, tag = 'scoped memory for tpu_custom_call.1']
    #allocation8 [shape = 's32[1]{0}', space=sflag, size = 0x4, scoped, tag = 'scoped memory for tpu_custom_call.1']
    #allocation9 [shape = 'u8[8192]{0}', space=vmem, size = 0x2000, scoped, tag = 'input window, operand 1, single buffered']
    #allocation10 [shape = 's32[1]{0}', space=sflag, size = 0x4, scoped, tag = 'scoped memory for tpu_custom_call.1']
    #allocation11 [shape = 'u8[16384]{0}', space=vmem, size = 0x4000, scoped, tag = 'output window, operand 0, single buffered']
    %7 = vsyncpa [#allocation7], 0
    %8 = vsyncpa [#allocation10], 0
    %9 = vsyncpa [#allocation8], 0
    // Predicated region
    $region2: #{tpu_custom_call.1} parent=1 // pred_check
      _
    $region3: #{tpu_custom_call.1} parent=1 // pred_check_branch
      %11 = sbr.rel (0) target = $region5
    $region4: #{tpu_custom_call.1} parent=1 // pred_region
      %s12 = sadd.s32 0, 0
      %s13 = smul.u32 2, %s12
      %s15 = ssub.s32 256, 256
      %16 = vsyncadd [#allocation7], %s15
      %s17 = smul.addr %s13, 128
      %s18 = scalar_lea.hbm %s0, %s17
      %s19 = sshll.u32 [#allocation6], 4
      %s20 = int_to_ptr.vmem [resolvable:$true] %s19
      %25 = dma.hbm_to_vmem [thread:$0]  %s18, 256, %s20, [#allocation7], 128, 128, 8
    $region5: #{tpu_custom_call.1} parent=1 // pred_fallthru
      _
    // Predicated region
    $region6: #{tpu_custom_call.1} parent=1 // pred_check
      _
    $region7: #{tpu_custom_call.1} parent=1 // pred_check_branch
      %27 = sbr.rel (0) target = $region9
    $region8: #{tpu_custom_call.1} parent=1 // pred_region
      %s28 = sadd.s32 0, 0
      %s29 = smul.u32 2, %s28
      %s31 = ssub.s32 256, 256
      %32 = vsyncadd [#allocation10], %s31
      %s33 = smul.addr %s29, 128
      %s34 = scalar_lea.hbm %s1, %s33
      %s35 = sshll.u32 [#allocation9], 4
      %s36 = int_to_ptr.vmem [resolvable:$true] %s35
      %41 = dma.hbm_to_vmem [thread:$0]  %s34, 256, %s36, [#allocation10], 128, 128, 8
    $region9: #{tpu_custom_call.1} parent=1 // pred_fallthru
      _
    // Predicated region
    $region10: #{tpu_custom_call.1} parent=1 // pred_check
      _
    $region11: #{tpu_custom_call.1} parent=1 // pred_check_branch
      %43 = sbr.rel (0) target = $region13
    $region12: #{tpu_custom_call.1} parent=1 // pred_region
      %44 = dma.done [#allocation7], 256
    $region13: #{tpu_custom_call.1} parent=1 // pred_fallthru
      _
    // Predicated region
    $region14: #{tpu_custom_call.1} parent=1 // pred_check
      _
    $region15: #{tpu_custom_call.1} parent=1 // pred_check_branch
      %46 = sbr.rel (0) target = $region17
    $region16: #{tpu_custom_call.1} parent=1 // pred_region
      %47 = dma.done [#allocation10], 256
    $region17: #{tpu_custom_call.1} parent=1 // pred_fallthru
      _
    %s48 = sadd.s32 0, 0
    %s49 = smul.u32 2, %s48
    %s50 = sadd.s32 0, 0
    %s51 = smul.u32 2, %s50
    %p52 = scmp.eq.s32.totalorder 0, 0
    // Predicated region
    $region18: #{tpu_custom_call.1} parent=1 // pred_check
      %p53 = pneg %p52
    $region19: #{tpu_custom_call.1} parent=1 // pred_check_branch
      %55 = sbr.rel (%p53) target = $region21
    $region20: #{tpu_custom_call.1} parent=1 // pred_region
      %56 = vst [vmem:[#allocation2] sm:$0xff] 0.0
      %57 = vst [vmem:[#allocation3] sm:$0xff] 0.0
      %58 = vst [vmem:[#allocation4] sm:$0xff] 0.0
      %59 = vst [vmem:[#allocation5] sm:$0xff] 0.0
    $region21: #{tpu_custom_call.1} parent=1 // pred_fallthru
      _
    %v60 = vld [vmem:[#allocation6] sm:$0xff]
    %v61 = vld [vmem:[#allocation6 + $0x8] sm:$0xff]
    %v62 = vld [vmem:[#allocation9] sm:$0xff]
    %v63 = vld [vmem:[#allocation9 + $0x8] sm:$0xff]
    %v64 = vand.u32 2147483647, %v60
    %v65 = vand.u32 2147483647, %v61
    %v66 = vsub.f32 0.0, %v64
    %v67 = vsub.f32 0.0, %v65
    %v68 = vmul.f32 %v66, 1.442695
    %v69 = vpow.pop %v68
    %v70 = vmul.f32 %v67, 1.442695
    %v71 = vpow.pop %v70
    %v72 = vadd.f32 %v69, 1.0
    %v73 = vadd.f32 %v71, 1.0
    %v74 = vrcp.pop %v72
    %v75 = vrcp.pop %v73
    %v76 = vmul.f32 %v72, %v74
    %v77 = vmul.f32 %v73, %v75
    %v78 = vsub.f32 2.0, %v76
    %v79 = vsub.f32 2.0, %v77
    %v80 = vmul.f32 %v74, %v78
    %v81 = vmul.f32 %v75, %v79
    %vm82 = vcmp.ge.f32.partialorder %v60, 0.0
    %vm83 = vcmp.ge.f32.partialorder %v61, 0.0
    %v84 = vmul.f32 %v69, %v80
    %v85 = vmul.f32 %v71, %v81
    %v86 = vsel %vm82, %v80, %v84
    %v87 = vsel %vm83, %v81, %v85
    %v88 = vmax.f32 %v60, 0.0
    %v89 = vmax.f32 %v61, 0.0
    %v90 = vmul.f32 %v60, %v62
    %v91 = vmul.f32 %v61, %v63
    %v92 = vsub.f32 %v88, %v90
    %v93 = vsub.f32 %v89, %v91
    %v94 = vadd.f32 %v69, 1.0
    %v95 = vlog2.pop %v94
    %v96 = vmul.f32 %v95, 0.6931472
    %v97 = vmul.f32 -0.5, %v69
    %v98 = vadd.f32 %v97, 1.0
    %v99 = vmul.f32 %v98, %v69
    %v100 = vand.u32 2147483647, %v69
    %vm101 = vcmp.lt.f32.partialorder %v100, 0.0004427343
    %v102 = vsel %vm101, %v99, %v96
    %v103 = vadd.f32 %v71, 1.0
    %v104 = vlog2.pop %v103
    %v105 = vmul.f32 %v104, 0.6931472
    %v106 = vmul.f32 -0.5, %v71
    %v107 = vadd.f32 %v106, 1.0
    %v108 = vmul.f32 %v107, %v71
    %v109 = vand.u32 2147483647, %v71
    %vm110 = vcmp.lt.f32.partialorder %v109, 0.0004427343
    %v111 = vsel %vm110, %v108, %v105
    %v112 = vadd.f32 %v92, %v102
    %v113 = vadd.f32 %v93, %v111
    %v114 = vmul.f32 %v86, %v62
    %v115 = vmul.f32 %v87, %v63
    %v116 = vld [vmem:[#allocation2] sm:$0xff]
    %v117 = vadd.f32 %v114, %v115
    %v118 = vadd.f32 %v116, %v117
    %119 = vst [vmem:[#allocation2] sm:$0xff] %v118
    %v120 = vld [vmem:[#allocation3] sm:$0xff]
    %v121 = vadd.f32 %v86, %v87
    %v122 = vadd.f32 %v120, %v121
    %123 = vst [vmem:[#allocation3] sm:$0xff] %v122
    %v124 = vld [vmem:[#allocation4] sm:$0xff]
    %v125 = vadd.f32 %v62, %v63
    %v126 = vadd.f32 %v124, %v125
    %127 = vst [vmem:[#allocation4] sm:$0xff] %v126
    %v128 = vld [vmem:[#allocation5] sm:$0xff]
    %v129 = vadd.f32 %v112, %v113
    %v130 = vadd.f32 %v128, %v129
    %131 = vst [vmem:[#allocation5] sm:$0xff] %v130
    // Predicated region
    $region22: #{tpu_custom_call.1} parent=1 // pred_check
      %p132 = pneg %p52
    $region23: #{tpu_custom_call.1} parent=1 // pred_check_branch
      %134 = sbr.rel (%p132) target = $region25
    $region24: #{tpu_custom_call.1} parent=1 // pred_region
      %v135 = vld [vmem:[#allocation2] sm:$0xff]
      %136 = vst [vmem:[#allocation11] sm:$0xff] %v135
      %v137 = vld [vmem:[#allocation3] sm:$0xff]
      %s138 = scalar_lea.vmem [#allocation11], 8
      %139 = vst [vmem:[%s138] sm:$0xff] %v137
      %v140 = vld [vmem:[#allocation4] sm:$0xff]
      %s141 = scalar_lea.vmem [#allocation11], 16
      %142 = vst [vmem:[%s141] sm:$0xff] %v140
      %v143 = vld [vmem:[#allocation5] sm:$0xff]
      %s144 = scalar_lea.vmem [#allocation11], 24
      %145 = vst [vmem:[%s144] sm:$0xff] %v143
    $region25: #{tpu_custom_call.1} parent=1 // pred_fallthru
      _
    // Predicated region
    $region26: #{tpu_custom_call.1} parent=1 // pred_check
      _
    $region27: #{tpu_custom_call.1} parent=1 // pred_check_branch
      %147 = sbr.rel (0) target = $region29
    $region28: #{tpu_custom_call.1} parent=1 // pred_region
      %s149 = ssub.s32 512, 512
      %150 = vsyncadd [#allocation8], %s149
      %s151 = sshll.u32 [#allocation11], 4
      %s152 = int_to_ptr.vmem [resolvable:$true] %s151
      %157 = dma.vmem_to_hbm [thread:$0]  %s152, 512, %s2, [#allocation8], 128, 128, 8
    $region29: #{tpu_custom_call.1} parent=1 // pred_fallthru
      _
    // Predicated region
    $region30: #{tpu_custom_call.1} parent=1 // pred_check
      _
    $region31: #{tpu_custom_call.1} parent=1 // pred_check_branch
      %159 = sbr.rel (0) target = $region33
    $region32: #{tpu_custom_call.1} parent=1 // pred_region
      %160 = dma.done [#allocation8], 512
    $region33: #{tpu_custom_call.1} parent=1 // pred_fallthru
      _
    %161 = vsyncpa [#allocation7], 1
    %162 = vsyncpa [#allocation10], 1
    %163 = vsyncpa [#allocation8], 1

</llo_original>
